<compile_context>
chip_gen: v7x
topology: tpu7x:2x2x1
jax: 0.10.0
libtpu: 0.0.40
codegen_flags: <defaults>
</compile_context>

<pallas_src>
import jax
import jax.numpy as jnp
from jax.experimental import pallas as pl
from jax.experimental.pallas import tpu as pltpu


def _patch_unembed_kernel(x_ref, o_ref):
    # x_ref: (BB, HW, C)  ->  o_ref: (BB, C, HW)
    # Static unroll over the (small) per-step batch; each iteration is a plain
    # 2-D minor-dim transpose, which lowers cleanly to the XLU.
    for i in range(x_ref.shape[0]):
        o_ref[i] = x_ref[i].T


def patch_unembed(x, x_size, *, vmem_budget_bytes=8 * 1024 * 1024):
    """PatchUnEmbed forward.

    x: (B, H*W, C) token layout; x_size: (H, W).
    Returns (B, C, H, W) image layout (same values, no compute).
    """
    B, HW, C = x.shape
    H, W = x_size
    assert HW == H * W, "token count must equal H*W"

    # How many batch elements per grid step: as many as fit a conservative VMEM
    # budget (input + output tiles, double-buffered by the pipeline), and an
    # exact divisor of B so every block is full.
    itemsize = jnp.dtype(x.dtype).itemsize
    bytes_per_b = 4 * HW * C * itemsize  # (in + out) x double-buffering
    bb = int(max(1, min(B, vmem_budget_bytes // max(1, bytes_per_b))))
    while B % bb != 0:
        bb -= 1

    grid = (B // bb,)

    out = pl.pallas_call(
        _patch_unembed_kernel,
        out_shape=jax.ShapeDtypeStruct((B, C, HW), x.dtype),
        grid_spec=pltpu.PrefetchScalarGridSpec(
            num_scalar_prefetch=0,
            grid=grid,
            in_specs=[pl.BlockSpec((bb, HW, C), lambda b: (b, 0, 0))],
            out_specs=pl.BlockSpec((bb, C, HW), lambda b: (b, 0, 0)),
        ),
        compiler_params=pltpu.CompilerParams(
            dimension_semantics=("parallel",)),
    )(x)

    # Free reshape of the flattened spatial axis back to (H, W).
    return out.reshape(B, C, H, W)


def _reference_jax(x, x_size):
    """Pure-JAX reference replicating the PyTorch forward exactly."""
    B, HW, C = x.shape
    H, W = x_size
    return jnp.transpose(x, (0, 2, 1)).reshape(B, C, H, W)


if __name__ == "__main__":
    # Small, module-consistent shapes: batch=2, embed_dim=32 channels, 16x16 spatial.
    B = 2
    embed_dim = 32
    H = W = 16
    HW = H * W

    key = jax.random.PRNGKey(0)
    x = jax.random.normal(key, (B, HW, embed_dim), jnp.float32)

    out = patch_unembed(x, (H, W))
    out = jax.block_until_ready(out)

    ref = _reference_jax(x, (H, W))
    assert out.shape == (B, embed_dim, H, W), "wrong output shape"
    assert jnp.array_equal(out, ref), "PatchUnEmbed mismatch"

    # TODO(synk): PatchUnEmbed has no parameters or compute (flops()==0); nothing else to model.
    print("KERNEL_OK")
</pallas_src>

<mosaic_0001>
module attributes {stable_mosaic.version = 11 : i64} {
  func.func @_patch_unembed_kernel(%arg0: i32, %arg1: memref<2x256x32xf32, #tpu.memory_space<vmem>>, %arg2: memref<2x32x256xf32, #tpu.memory_space<vmem>>) attributes {dimension_semantics = [#tpu.dimension_semantics<parallel>], iteration_bounds = array<i64: 1>, scalar_prefetch = 0 : i64, scratch_operands = 0 : i64, tpu.core_type = #tpu.core_type<tc>, window_params = [{transform_indices = @transform_0, window_bounds = array<i64: 2, 256, 32>}, {transform_indices = @transform_1, window_bounds = array<i64: 2, 32, 256>}]} {
    %c0 = arith.constant 0 : index
    %c0_0 = arith.constant 0 : index
    %c0_1 = arith.constant 0 : index
    %0 = vector.load %arg1[%c0, %c0_0, %c0_1] : memref<2x256x32xf32, #tpu.memory_space<vmem>>, vector<1x256x32xf32>
    %1 = vector.shape_cast %0 : vector<1x256x32xf32> to vector<256x32xf32>
    %2 = tpu.transpose %1, [1, 0] : vector<256x32xf32> -> vector<32x256xf32>
    %c0_2 = arith.constant 0 : index
    %c0_3 = arith.constant 0 : index
    %c0_4 = arith.constant 0 : index
    %3 = vector.load %arg2[%c0_2, %c0_3, %c0_4] : memref<2x32x256xf32, #tpu.memory_space<vmem>>, vector<1x32x256xf32>
    %4 = vector.shape_cast %3 : vector<1x32x256xf32> to vector<32x256xf32>
    %5 = vector.shape_cast %2 : vector<32x256xf32> to vector<1x32x256xf32>
    tpu.vector_store %arg2[%c0_2, %c0_3, %c0_4], %5 {strides = array<i32>} : memref<2x32x256xf32, #tpu.memory_space<vmem>>, vector<1x32x256xf32>,
    %c1 = arith.constant 1 : index
    %c0_5 = arith.constant 0 : index
    %c0_6 = arith.constant 0 : index
    %6 = vector.load %arg1[%c1, %c0_5, %c0_6] : memref<2x256x32xf32, #tpu.memory_space<vmem>>, vector<1x256x32xf32>
    %7 = vector.shape_cast %6 : vector<1x256x32xf32> to vector<256x32xf32>
    %8 = tpu.transpose %7, [1, 0] : vector<256x32xf32> -> vector<32x256xf32>
    %c1_7 = arith.constant 1 : index
    %c0_8 = arith.constant 0 : index
    %c0_9 = arith.constant 0 : index
    %9 = vector.load %arg2[%c1_7, %c0_8, %c0_9] : memref<2x32x256xf32, #tpu.memory_space<vmem>>, vector<1x32x256xf32>
    %10 = vector.shape_cast %9 : vector<1x32x256xf32> to vector<32x256xf32>
    %11 = vector.shape_cast %8 : vector<32x256xf32> to vector<1x32x256xf32>
    tpu.vector_store %arg2[%c1_7, %c0_8, %c0_9], %11 {strides = array<i32>} : memref<2x32x256xf32, #tpu.memory_space<vmem>>, vector<1x32x256xf32>,
    return
  }
  func.func @transform_0(%arg0: i32) -> (i32, i32, i32) {
    %c0_i32 = arith.constant 0 : i32
    %c0_i32_0 = arith.constant 0 : i32
    %c0_i32_1 = arith.constant 0 : i32
    return %arg0, %c0_i32, %c0_i32_0 : i32, i32, i32
  }
  func.func @transform_1(%arg0: i32) -> (i32, i32, i32) {
    %c0_i32 = arith.constant 0 : i32
    %c0_i32_0 = arith.constant 0 : i32
    %c0_i32_1 = arith.constant 0 : i32
    return %arg0, %c0_i32, %c0_i32_0 : i32, i32, i32
  }
}

</mosaic_0001>

<llo_original>
// kernel: tpu_custom_call.1
$region0: #{tpu_custom_call.1}
  #allocation0 [shape = 'u32[]', space=smem, size = 0x4, offset = 0x4, fixed_abs, tag = 'smem constant byte address 0x4 - core index']
  #allocation1 [shape = 'u32[144,128]{1,0:T(1,128)}', space=vmem, size = 0x12000, scoped, tag = 'internal scratch']
  %s0 = inlined_call_operand.vmem [shape: f32[2,256,32], index: 0, kind: input, shape index: {}]
  %s1 = inlined_call_operand.hbm [shape: f32[2,32,256], index: 1, kind: output, shape index: {}]
  %s2 = sld [smem:[#allocation0]]
  $region14: #{tpu_custom_call.1} parent=0
    _
  %s4 = ssub.s32 1, %s2
  %s5 = scalar_select 0, %s4, %s2
  $region1: #{tpu_custom_call.1} parent=0
    #allocation2 [shape = 'u8[65536]{0}', space=vmem, size = 0x10000, scoped, tag = 'output window, operand 0, single buffered']
    #allocation3 [shape = 's32[1]{0}', space=sflag, size = 0x4, scoped, tag = 'scoped memory for tpu_custom_call.1']
    %6 = vsyncpa [#allocation3], 0
    // Predicated region
    $region2: #{tpu_custom_call.1} parent=1 // pred_check
      _
    $region3: #{tpu_custom_call.1} parent=1 // pred_check_branch
      %8 = sbr.rel (0) target = $region5
    $region4: #{tpu_custom_call.1} parent=1 // pred_region
      _
    $region5: #{tpu_custom_call.1} parent=1 // pred_fallthru
      _
    %v9 = vld [vmem:[%s0] sm:$0xff]
    %v10 = vld [vmem:[%s0 + $0x8] sm:$0xff]
    %v11 = vld [vmem:[%s0 + $0x10] sm:$0xff]
    %v12 = vld [vmem:[%s0 + $0x18] sm:$0xff]
    %v13 = vld [vmem:[%s0 + $0x20] sm:$0xff]
    %v14 = vld [vmem:[%s0 + $0x28] sm:$0xff]
    %v15 = vld [vmem:[%s0 + $0x30] sm:$0xff]
    %v16 = vld [vmem:[%s0 + $0x38] sm:$0xff]
    %v17 = vld [vmem:[%s0 + $0x40] sm:$0xff]
    %v18 = vld [vmem:[%s0 + $0x48] sm:$0xff]
    %v19 = vld [vmem:[%s0 + $0x50] sm:$0xff]
    %v20 = vld [vmem:[%s0 + $0x58] sm:$0xff]
    %v21 = vld [vmem:[%s0 + $0x60] sm:$0xff]
    %v22 = vld [vmem:[%s0 + $0x68] sm:$0xff]
    %v23 = vld [vmem:[%s0 + $0x70] sm:$0xff]
    %v24 = vld [vmem:[%s0 + $0x78] sm:$0xff]
    %v25 = vld [vmem:[%s0 + $0x80] sm:$0xff]
    %v26 = vld [vmem:[%s0 + $0x88] sm:$0xff]
    %v27 = vld [vmem:[%s0 + $0x90] sm:$0xff]
    %v28 = vld [vmem:[%s0 + $0x98] sm:$0xff]
    %v29 = vld [vmem:[%s0 + $0xa0] sm:$0xff]
    %v30 = vld [vmem:[%s0 + $0xa8] sm:$0xff]
    %v31 = vld [vmem:[%s0 + $0xb0] sm:$0xff]
    %v32 = vld [vmem:[%s0 + $0xb8] sm:$0xff]
    %v33 = vld [vmem:[%s0 + $0xc0] sm:$0xff]
    %v34 = vld [vmem:[%s0 + $0xc8] sm:$0xff]
    %v35 = vld [vmem:[%s0 + $0xd0] sm:$0xff]
    %v36 = vld [vmem:[%s0 + $0xd8] sm:$0xff]
    %v37 = vld [vmem:[%s0 + $0xe0] sm:$0xff]
    %v38 = vld [vmem:[%s0 + $0xe8] sm:$0xff]
    %v39 = vld [vmem:[%s0 + $0xf0] sm:$0xff]
    %v40 = vld [vmem:[%s0 + $0xf8] sm:$0xff]
    %41 = vxpose.xlu0.b32.start [1/16] %v9, 128
    %42 = vxpose.xlu0.b32.cont [2/16] %v10, 128
    %43 = vxpose.xlu0.b32.cont [3/16] %v11, 128
    %44 = vxpose.xlu0.b32.cont [4/16] %v12, 128
    %45 = vxpose.xlu0.b32.cont [5/16] %v13, 128
    %46 = vxpose.xlu0.b32.cont [6/16] %v14, 128
    %47 = vxpose.xlu0.b32.cont [7/16] %v15, 128
    %48 = vxpose.xlu0.b32.cont [8/16] %v16, 128
    %49 = vxpose.xlu0.b32.cont [9/16] %v17, 128
    %50 = vxpose.xlu0.b32.cont [10/16] %v18, 128
    %51 = vxpose.xlu0.b32.cont [11/16] %v19, 128
    %52 = vxpose.xlu0.b32.cont [12/16] %v20, 128
    %53 = vxpose.xlu0.b32.cont [13/16] %v21, 128
    %54 = vxpose.xlu0.b32.cont [14/16] %v22, 128
    %55 = vxpose.xlu0.b32.cont [15/16] %v23, 128
    %56 = vxpose.xlu0.b32.end [16/16] %v24, 128
    %v57 = vpop.trf.xlu0
    %v58 = vpop.trf.xlu0
    %v59 = vpop.trf.xlu0
    %v60 = vpop.trf.xlu0
    %v61 = vpop.trf.xlu0
    %v62 = vpop.trf.xlu0
    %v63 = vpop.trf.xlu0
    %v64 = vpop.trf.xlu0
    %v65 = vpop.trf.xlu0
    %v66 = vpop.trf.xlu0
    %v67 = vpop.trf.xlu0
    %v68 = vpop.trf.xlu0
    %v69 = vpop.trf.xlu0
    %v70 = vpop.trf.xlu0
    %v71 = vpop.trf.xlu0
    %v72 = vpop.trf.xlu0
    %73 = vxpose.xlu0.b32.start [1/16] %v25, 128
    %74 = vxpose.xlu0.b32.cont [2/16] %v26, 128
    %75 = vxpose.xlu0.b32.cont [3/16] %v27, 128
    %76 = vxpose.xlu0.b32.cont [4/16] %v28, 128
    %77 = vxpose.xlu0.b32.cont [5/16] %v29, 128
    %78 = vxpose.xlu0.b32.cont [6/16] %v30, 128
    %79 = vxpose.xlu0.b32.cont [7/16] %v31, 128
    %80 = vxpose.xlu0.b32.cont [8/16] %v32, 128
    %81 = vxpose.xlu0.b32.cont [9/16] %v33, 128
    %82 = vxpose.xlu0.b32.cont [10/16] %v34, 128
    %83 = vxpose.xlu0.b32.cont [11/16] %v35, 128
    %84 = vxpose.xlu0.b32.cont [12/16] %v36, 128
    %85 = vxpose.xlu0.b32.cont [13/16] %v37, 128
    %86 = vxpose.xlu0.b32.cont [14/16] %v38, 128
    %87 = vxpose.xlu0.b32.cont [15/16] %v39, 128
    %88 = vxpose.xlu0.b32.end [16/16] %v40, 128
    %v89 = vpop.trf.xlu0
    %v90 = vpop.trf.xlu0
    %v91 = vpop.trf.xlu0
    %v92 = vpop.trf.xlu0
    %v93 = vpop.trf.xlu0
    %v94 = vpop.trf.xlu0
    %v95 = vpop.trf.xlu0
    %v96 = vpop.trf.xlu0
    %v97 = vpop.trf.xlu0
    %v98 = vpop.trf.xlu0
    %v99 = vpop.trf.xlu0
    %v100 = vpop.trf.xlu0
    %v101 = vpop.trf.xlu0
    %v102 = vpop.trf.xlu0
    %v103 = vpop.trf.xlu0
    %v104 = vpop.trf.xlu0
    %105 = vst [vmem:[#allocation2] sm:$0xff] %v57
    %106 = vst [vmem:[#allocation2 + $0x8] sm:$0xff] %v89
    %107 = vst [vmem:[#allocation2 + $0x10] sm:$0xff] %v58
    %108 = vst [vmem:[#allocation2 + $0x18] sm:$0xff] %v90
    %109 = vst [vmem:[#allocation2 + $0x20] sm:$0xff] %v59
    %110 = vst [vmem:[#allocation2 + $0x28] sm:$0xff] %v91
    %111 = vst [vmem:[#allocation2 + $0x30] sm:$0xff] %v60
    %112 = vst [vmem:[#allocation2 + $0x38] sm:$0xff] %v92
    %s113 = scalar_lea.vmem %s0, 256
    %v114 = vld [vmem:[%s113] sm:$0xff]
    %v115 = vld [vmem:[%s113 + $0x8] sm:$0xff]
    %v116 = vld [vmem:[%s113 + $0x10] sm:$0xff]
    %v117 = vld [vmem:[%s113 + $0x18] sm:$0xff]
    %v118 = vld [vmem:[%s113 + $0x20] sm:$0xff]
    %v119 = vld [vmem:[%s113 + $0x28] sm:$0xff]
    %v120 = vld [vmem:[%s113 + $0x30] sm:$0xff]
    %v121 = vld [vmem:[%s113 + $0x38] sm:$0xff]
    %v122 = vld [vmem:[%s113 + $0x40] sm:$0xff]
    %v123 = vld [vmem:[%s113 + $0x48] sm:$0xff]
    %v124 = vld [vmem:[%s113 + $0x50] sm:$0xff]
    %v125 = vld [vmem:[%s113 + $0x58] sm:$0xff]
    %v126 = vld [vmem:[%s113 + $0x60] sm:$0xff]
    %v127 = vld [vmem:[%s113 + $0x68] sm:$0xff]
    %v128 = vld [vmem:[%s113 + $0x70] sm:$0xff]
    %v129 = vld [vmem:[%s113 + $0x78] sm:$0xff]
    %v130 = vld [vmem:[%s113 + $0x80] sm:$0xff]
    %v131 = vld [vmem:[%s113 + $0x88] sm:$0xff]
    %v132 = vld [vmem:[%s113 + $0x90] sm:$0xff]
    %v133 = vld [vmem:[%s113 + $0x98] sm:$0xff]
    %v134 = vld [vmem:[%s113 + $0xa0] sm:$0xff]
    %v135 = vld [vmem:[%s113 + $0xa8] sm:$0xff]
    %v136 = vld [vmem:[%s113 + $0xb0] sm:$0xff]
    %v137 = vld [vmem:[%s113 + $0xb8] sm:$0xff]
    %v138 = vld [vmem:[%s113 + $0xc0] sm:$0xff]
    %v139 = vld [vmem:[%s113 + $0xc8] sm:$0xff]
    %v140 = vld [vmem:[%s113 + $0xd0] sm:$0xff]
    %v141 = vld [vmem:[%s113 + $0xd8] sm:$0xff]
    %v142 = vld [vmem:[%s113 + $0xe0] sm:$0xff]
    %v143 = vld [vmem:[%s113 + $0xe8] sm:$0xff]
    %v144 = vld [vmem:[%s113 + $0xf0] sm:$0xff]
    %v145 = vld [vmem:[%s113 + $0xf8] sm:$0xff]
    %146 = vxpose.xlu0.b32.start [1/16] %v114, 128
    %147 = vxpose.xlu0.b32.cont [2/16] %v115, 128
    %148 = vxpose.xlu0.b32.cont [3/16] %v116, 128
    %149 = vxpose.xlu0.b32.cont [4/16] %v117, 128
    %150 = vxpose.xlu0.b32.cont [5/16] %v118, 128
    %151 = vxpose.xlu0.b32.cont [6/16] %v119, 128
    %152 = vxpose.xlu0.b32.cont [7/16] %v120, 128
    %153 = vxpose.xlu0.b32.cont [8/16] %v121, 128
    %154 = vxpose.xlu0.b32.cont [9/16] %v122, 128
    %155 = vxpose.xlu0.b32.cont [10/16] %v123, 128
    %156 = vxpose.xlu0.b32.cont [11/16] %v124, 128
    %157 = vxpose.xlu0.b32.cont [12/16] %v125, 128
    %158 = vxpose.xlu0.b32.cont [13/16] %v126, 128
    %159 = vxpose.xlu0.b32.cont [14/16] %v127, 128
    %160 = vxpose.xlu0.b32.cont [15/16] %v128, 128
    %161 = vxpose.xlu0.b32.end [16/16] %v129, 128
    %v162 = vpop.trf.xlu0
    %v163 = vpop.trf.xlu0
    %v164 = vpop.trf.xlu0
    %v165 = vpop.trf.xlu0
    %v166 = vpop.trf.xlu0
    %v167 = vpop.trf.xlu0
    %v168 = vpop.trf.xlu0
    %v169 = vpop.trf.xlu0
    %v170 = vpop.trf.xlu0
    %v171 = vpop.trf.xlu0
    %v172 = vpop.trf.xlu0
    %v173 = vpop.trf.xlu0
    %v174 = vpop.trf.xlu0
    %v175 = vpop.trf.xlu0
    %v176 = vpop.trf.xlu0
    %v177 = vpop.trf.xlu0
    %178 = vxpose.xlu0.b32.start [1/16] %v130, 128
    %179 = vxpose.xlu0.b32.cont [2/16] %v131, 128
    %180 = vxpose.xlu0.b32.cont [3/16] %v132, 128
    %181 = vxpose.xlu0.b32.cont [4/16] %v133, 128
    %182 = vxpose.xlu0.b32.cont [5/16] %v134, 128
    %183 = vxpose.xlu0.b32.cont [6/16] %v135, 128
    %184 = vxpose.xlu0.b32.cont [7/16] %v136, 128
    %185 = vxpose.xlu0.b32.cont [8/16] %v137, 128
    %186 = vxpose.xlu0.b32.cont [9/16] %v138, 128
    %187 = vxpose.xlu0.b32.cont [10/16] %v139, 128
    %188 = vxpose.xlu0.b32.cont [11/16] %v140, 128
    %189 = vxpose.xlu0.b32.cont [12/16] %v141, 128
    %190 = vxpose.xlu0.b32.cont [13/16] %v142, 128
    %191 = vxpose.xlu0.b32.cont [14/16] %v143, 128
    %192 = vxpose.xlu0.b32.cont [15/16] %v144, 128
    %193 = vxpose.xlu0.b32.end [16/16] %v145, 128
    %v194 = vpop.trf.xlu0
    %v195 = vpop.trf.xlu0
    %v196 = vpop.trf.xlu0
    %v197 = vpop.trf.xlu0
    %v198 = vpop.trf.xlu0
    %v199 = vpop.trf.xlu0
    %v200 = vpop.trf.xlu0
    %v201 = vpop.trf.xlu0
    %v202 = vpop.trf.xlu0
    %v203 = vpop.trf.xlu0
    %v204 = vpop.trf.xlu0
    %v205 = vpop.trf.xlu0
    %v206 = vpop.trf.xlu0
    %v207 = vpop.trf.xlu0
    %v208 = vpop.trf.xlu0
    %v209 = vpop.trf.xlu0
    %s210 = scalar_lea.vmem [#allocation2], 64
    %211 = vst [vmem:[%s210] sm:$0xff] %v162
    %212 = vst [vmem:[%s210 + $0x8] sm:$0xff] %v194
    %213 = vst [vmem:[%s210 + $0x10] sm:$0xff] %v163
    %214 = vst [vmem:[%s210 + $0x18] sm:$0xff] %v195
    %215 = vst [vmem:[%s210 + $0x20] sm:$0xff] %v164
    %216 = vst [vmem:[%s210 + $0x28] sm:$0xff] %v196
    %217 = vst [vmem:[%s210 + $0x30] sm:$0xff] %v165
    %218 = vst [vmem:[%s210 + $0x38] sm:$0xff] %v197
    // Predicated region
    $region6: #{tpu_custom_call.1} parent=1 // pred_check
      _
    $region7: #{tpu_custom_call.1} parent=1 // pred_check_branch
      %220 = sbr.rel (0) target = $region9
    $region8: #{tpu_custom_call.1} parent=1 // pred_region
      %s222 = ssub.s32 2048, 2048
      %223 = vsyncadd [#allocation3], %s222
      %s224 = sshll.u32 [#allocation2], 4
      %s225 = int_to_ptr.vmem [resolvable:$true] %s224
      %230 = dma.vmem_to_hbm [thread:$0]  %s225, 2048, %s1, [#allocation3], 256, 256, 16
    $region9: #{tpu_custom_call.1} parent=1 // pred_fallthru
      _
    // Predicated region
    $region10: #{tpu_custom_call.1} parent=1 // pred_check
      _
    $region11: #{tpu_custom_call.1} parent=1 // pred_check_branch
      %232 = sbr.rel (0) target = $region13
    $region12: #{tpu_custom_call.1} parent=1 // pred_region
      %233 = dma.done [#allocation3], 2048
    $region13: #{tpu_custom_call.1} parent=1 // pred_fallthru
      _
    %234 = vsyncpa [#allocation3], 1

</llo_original>
